<compile_context>
chip_gen: v6e
topology: v6e:2x2x1
jax: 0.10.0
libtpu: 0.0.40
codegen_flags: <defaults>
</compile_context>

<pallas_src>
import jax
import jax.numpy as jnp
import numpy as np
from jax import lax
from jax.experimental import pallas as pl
from jax.experimental.pallas import tpu as pltpu

QDIM = 128  # q-projection width, fixed by the module: nn.Linear(input_size, 128)


def _bclassifier_kernel(feats_ref, c_ref, slab_ref, out_ref):
    f32 = jnp.float32
    _, N, D = feats_ref.shape          # per-bag block: [1, N, D]
    K = c_ref.shape[2]
    C = slab_ref.shape[0] - D - 2 - K  # static (slab rows = D + 2 + K + C)

    # --- unpack the parameter slab (static, 128-lane-aligned slices) --------
    # rows [0:D]      : weights  (q @ lanes 0:128, v @ 128:128+D, lin @ 256:256+D)
    # row  D          : biases   (same lane layout)
    # row  D+1        : fcc bias (lanes 0:C)
    # rows [D+2:D+2+K]: Wstack   (Wstack[k, c*128+d] = w_fcc[c,k,d])
    # rows [D+2+K: +C]: class selector (sel[c, j] = 1 iff j // 128 == c)
    w_qv = slab_ref[0:D, 0:2 * QDIM]                         # [D, 256]
    b_qv = slab_ref[D:D + 1, 0:2 * QDIM]                     # [1, 256]
    w_lin = slab_ref[0:D, 2 * QDIM:2 * QDIM + D]             # [D, D] (lane-aligned start)
    b_lin = slab_ref[D:D + 1, 2 * QDIM:2 * QDIM + D]         # [1, D]
    b_fcc = slab_ref[D + 1:D + 2, 0:C]                       # [1, C]
    wfcc = slab_ref[D + 2:D + 2 + K, 0:C * QDIM]             # [K, C*128]
    sel = slab_ref[D + 2 + K:D + 2 + K + C, 0:C * QDIM]      # [C, C*128]

    feats = feats_ref[0]                                     # [N, D]
    c_vals = c_ref[0]                                        # [N, K]

    # lin: ReLU(Linear(D -> D))
    h = jnp.maximum(
        jnp.dot(feats, w_lin, preferred_element_type=f32) + b_lin, 0.0)    # [N, D]

    # fused q/v projection: one 256-lane MXU pass (v columns D:128 are zero-padded)
    zv = jnp.dot(h, w_qv, preferred_element_type=f32) + b_qv                # [N, 256]
    Q = jnp.tanh(zv[:, 0:QDIM])                                             # [N, 128]
    V = zv[:, QDIM:2 * QDIM]                                                # [N, 128], lanes D: are exact 0
    # (Dropout(p=0) == identity)

    # critical instance per class: first row index attaining the column max of c
    max_c = jnp.max(c_vals, axis=0, keepdims=True)                          # [1, K]
    row_ids = lax.broadcasted_iota(jnp.int32, (N, K), 0)                    # [N, K]
    idx = jnp.min(jnp.where(c_vals == max_c, row_ids, N),
                  axis=0, keepdims=True)                                    # [1, K]
    onehot = (row_ids == idx).astype(f32)                                   # [N, K]

    # q_max = Q[idx]: the gather commutes with the row-wise tanh(Linear), so no
    # second w_q matmul / tanh.  Contract over N via dot_general (no .T).
    # TODO(synk): review suggests building the selector pre-transposed ([K, N])
    # to avoid a Mosaic-inserted relayout; kept on the lowering path proven
    # on-HW — noise at K=4, N=8.
    q_max = lax.dot_general(onehot, Q, (((0,), (0,)), ((), ())),
                            preferred_element_type=f32)                     # [K, 128]

    # attention scores + softmax over instances (axis 0)
    scores = lax.dot_general(Q, q_max, (((1,), (1,)), ((), ())),
                             preferred_element_type=f32)                    # [N, K]
    scores = scores * (1.0 / jnp.sqrt(jnp.float32(QDIM)))
    scores = scores - jnp.max(scores, axis=0, keepdims=True)
    e = jnp.exp(scores)
    denom = jnp.sum(e, axis=0, keepdims=True)                               # [1, K]
    A = e / denom                                                           # exact reciprocal (4 elems)

    # fcc (Conv1d(K, C, kernel_size=D) on B = A^T V) folded into aggregation,
    # all contractions on the MXU (the XLU per-class reduces are gone):
    #   R    = A @ Wstack                        [N, C*128]
    #   P    = R * tile(V, C)                    [N, C*128]   (class-block aligned)
    #   psum = ones[1,N] @ P                     [1, C*128]
    #   y    = psum @ sel^T + b_fcc              [1, C]
    R = jnp.dot(A, wfcc, preferred_element_type=f32)                        # [N, C*128]
    P = R * jnp.concatenate([V] * C, axis=1)                                # [N, C*128]
    ones_row = jnp.ones((1, N), f32)
    psum = jnp.dot(ones_row, P, preferred_element_type=f32)                 # [1, C*128]
    y_row = lax.dot_general(psum, sel, (((1,), (1,)), ((), ())),
                            preferred_element_type=f32) + b_fcc             # [1, C]

    # Y_hat = argmax over classes (first index), computed in-kernel.
    # TODO(synk): returns C (out of range) if y_row contains NaN, unlike argmax.
    col_ids = lax.broadcasted_iota(jnp.int32, (1, C), 1)                    # [1, C]
    y_max = jnp.max(y_row, axis=1, keepdims=True)                           # [1, 1]
    y_hat = jnp.min(jnp.where(y_row == y_max, col_ids, C),
                    axis=1, keepdims=True)                                  # [1, 1] int32

    # --- pack ONE lane-dense [N, 128] output tile (single unmasked store) ---
    # lanes [0:K) all rows = A; row 0 lanes [K:K+C) = Y_prob; row 0 lane K+C = Y_hat.
    extra_row0 = jnp.concatenate(
        [y_row, y_hat.astype(f32),
         jnp.zeros((1, QDIM - K - C - 1), f32)], axis=1)                    # [1, 128-K]
    extras = jnp.concatenate(
        [extra_row0, jnp.zeros((N - 1, QDIM - K), f32)], axis=0)            # [N, 128-K]
    out_ref[0, :, :] = jnp.concatenate([A, extras], axis=1)                 # [N, 128]


def pack_bclassifier_params(params):
    """Host-side, ONCE (outside jit): pack all params into ONE 128-lane-aligned slab."""
    w_q = np.asarray(params["w_q"], np.float32)      # [D, 128]
    b_q = np.asarray(params["b_q"], np.float32)      # [1, 128]
    w_v = np.asarray(params["w_v"], np.float32)      # [D, D]
    b_v = np.asarray(params["b_v"], np.float32)      # [1, D]
    w_lin = np.asarray(params["w_lin"], np.float32)  # [D, D]
    b_lin = np.asarray(params["b_lin"], np.float32)  # [1, D]
    w_fcc = np.asarray(params["w_fcc"], np.float32)  # [C, K, D]
    b_fcc = np.asarray(params["b_fcc"], np.float32)  # [1, C]

    D = w_lin.shape[0]
    C, K, _ = w_fcc.shape
    assert D <= 128 and w_q.shape[1] == QDIM and K + C + 1 <= QDIM

    SW = max(3 * QDIM, C * QDIM)       # slab lane width (all segments 128-aligned)
    SR = D + 2 + K + C                 # weight rows + bias row + fcc-bias row + wfcc + selector
    slab = np.zeros((SR, SW), np.float32)

    slab[0:D, 0:QDIM] = w_q
    slab[0:D, QDIM:QDIM + D] = w_v
    slab[0:D, 2 * QDIM:2 * QDIM + D] = w_lin
    slab[D, 0:QDIM] = b_q[0]
    slab[D, QDIM:QDIM + D] = b_v[0]
    slab[D, 2 * QDIM:2 * QDIM + D] = b_lin[0]
    slab[D + 1, 0:C] = b_fcc[0]
    for cc in range(C):
        # Wstack[k, cc*128 + d] = w_fcc[cc, k, d]  (class block lane-aligned)
        slab[D + 2:D + 2 + K, cc * QDIM:cc * QDIM + D] = w_fcc[cc]
        # class-block selector row
        slab[D + 2 + K + cc, cc * QDIM:(cc + 1) * QDIM] = 1.0
    return jnp.asarray(slab)


def bclassifier_forward_batched(feats_b, c_b, slab):
    """feats_b: [B, N, D], c_b: [B, N, K] -> lane-dense output slab [B, N, 128]."""
    B, N, D = feats_b.shape
    K = c_b.shape[2]
    SR, SW = slab.shape
    C = SR - D - 2 - K

    flops = B * (2 * N * D * D            # lin
                 + 2 * N * D * 2 * QDIM   # fused q/v
                 + 2 * K * N * QDIM       # q_max gather
                 + 2 * N * QDIM * K       # scores
                 + 2 * N * K * C * QDIM   # A @ Wstack
                 + 2 * N * C * QDIM       # ones @ P
                 + 2 * C * QDIM * C)      # psum @ sel
    transcendentals = B * (N * QDIM + N * K)                       # tanh + exp
    bytes_accessed = 4 * (feats_b.size + c_b.size + slab.size + B * N * QDIM)

    return pl.pallas_call(
        _bclassifier_kernel,
        out_shape=jax.ShapeDtypeStruct((B, N, QDIM), jnp.float32),
        grid_spec=pltpu.PrefetchScalarGridSpec(
            num_scalar_prefetch=0,
            grid=(B,),
            in_specs=[
                pl.BlockSpec((1, N, D), lambda b: (b, 0, 0)),
                pl.BlockSpec((1, N, K), lambda b: (b, 0, 0)),
                # weights: same block every step -> stays VMEM-resident across the grid
                pl.BlockSpec((SR, SW), lambda b: (0, 0)),
            ],
            out_specs=pl.BlockSpec((1, N, QDIM), lambda b: (b, 0, 0)),
        ),
        compiler_params=pltpu.CompilerParams(
            dimension_semantics=("parallel",)),   # v7x: 2 TCs split the bag axis
        cost_estimate=pl.CostEstimate(flops=flops,
                                      transcendentals=transcendentals,
                                      bytes_accessed=bytes_accessed),
    )(feats_b, c_b, slab)


def bclassifier_forward(feats, c, slab):
    """Single-bag forward matching the PyTorch module: (Y_prob [1,C], Y_hat [1], A [N,K])."""
    N, D = feats.shape
    K = c.shape[1]
    C = slab.shape[0] - D - 2 - K
    o = bclassifier_forward_batched(feats[None], c[None], slab)[0]   # [N, 128]
    A = o[:, :K]
    y_prob = o[0:1, K:K + C]
    y_hat = o[0, K + C].astype(jnp.int32).reshape((1,))
    return y_prob, y_hat, A


def _reference_forward(feats, c, params):
    """Pure-JAX reference matching the PyTorch module semantics."""
    h = jnp.maximum(feats @ params["w_lin"] + params["b_lin"], 0.0)
    V = h @ params["w_v"] + params["b_v"]
    Q = jnp.tanh(h @ params["w_q"] + params["b_q"])
    idx = jnp.argmax(c, axis=0)                       # m_indices[0, :]
    m_feats = h[idx]
    q_max = jnp.tanh(m_feats @ params["w_q"] + params["b_q"])
    A = jax.nn.softmax((Q @ q_max.T) / jnp.sqrt(jnp.float32(QDIM)), axis=0)
    B = A.T @ V
    logits = jnp.einsum("ckd,kd->c", params["w_fcc"], B)[None, :] + params["b_fcc"]
    return logits, jnp.argmax(logits, axis=1), A


if __name__ == "__main__":
    # Small shapes consistent with the module:
    #   N = 8 instances per bag, input_size D = 32, output_class K = 4, C = 2
    N, D, K, C_out, B = 8, 32, 4, 2, 3

    key = jax.random.PRNGKey(0)
    ks = jax.random.split(key, 14)

    params = {
        "w_lin": 0.1 * jax.random.normal(ks[2], (D, D), jnp.float32),
        "b_lin": 0.1 * jax.random.normal(ks[3], (1, D), jnp.float32),
        "w_q":   0.1 * jax.random.normal(ks[4], (D, QDIM), jnp.float32),
        "b_q":   0.1 * jax.random.normal(ks[5], (1, QDIM), jnp.float32),
        "w_v":   0.1 * jax.random.normal(ks[6], (D, D), jnp.float32),
        "b_v":   0.1 * jax.random.normal(ks[7], (1, D), jnp.float32),
        # Conv1d weight [out_channels=C, in_channels=K, kernel_size=D], bias [1, C]
        "w_fcc": 0.1 * jax.random.normal(ks[8], (C_out, K, D), jnp.float32),
        "b_fcc": 0.1 * jax.random.normal(ks[9], (1, C_out), jnp.float32),
    }

    slab = pack_bclassifier_params(params)   # once, outside jit

    # --- single-bag path (matches the module's forward signature) -----------
    feats = jax.random.normal(ks[0], (N, D), jnp.float32)
    c = jax.random.normal(ks[1], (N, K), jnp.float32)

    fwd = jax.jit(bclassifier_forward)
    y_prob, y_hat, A = fwd(feats, c, slab)
    jax.block_until_ready((y_prob, y_hat, A))

    assert y_prob.shape == (1, C_out)
    assert y_hat.shape == (1,)
    assert A.shape == (N, K)

    ref_prob, ref_hat, ref_A = _reference_forward(feats, c, params)
    np.testing.assert_allclose(np.asarray(y_prob), np.asarray(ref_prob),
                               rtol=1e-2, atol=1e-2)
    np.testing.assert_allclose(np.asarray(A), np.asarray(ref_A),
                               rtol=1e-2, atol=1e-2)
    assert int(y_hat[0]) == int(ref_hat[0])

    # --- batched path: many bags per pallas_call (parallel grid axis) --------
    feats_b = jax.random.normal(ks[10], (B, N, D), jnp.float32)
    c_b = jax.random.normal(ks[11], (B, N, K), jnp.float32)

    fwd_b = jax.jit(bclassifier_forward_batched)
    out_b = fwd_b(feats_b, c_b, slab)
    jax.block_until_ready(out_b)
    assert out_b.shape == (B, N, QDIM)

    for b in range(B):
        rp, rh, rA = _reference_forward(feats_b[b], c_b[b], params)
        np.testing.assert_allclose(np.asarray(out_b[b, :, :K]), np.asarray(rA),
                                   rtol=1e-2, atol=1e-2)
        np.testing.assert_allclose(np.asarray(out_b[b, 0:1, K:K + C_out]),
                                   np.asarray(rp), rtol=1e-2, atol=1e-2)
        assert int(out_b[b, 0, K + C_out]) == int(rh[0])

    print("KERNEL_OK")
</pallas_src>

<mosaic_0001>
module attributes {stable_mosaic.version = 11 : i64} {
  func.func @_bclassifier_kernel(%arg0: i32, %arg1: memref<1x8x32xf32, #tpu.memory_space<vmem>>, %arg2: memref<1x8x4xf32, #tpu.memory_space<vmem>>, %arg3: memref<40x384xf32, #tpu.memory_space<vmem>>, %arg4: memref<1x8x128xf32, #tpu.memory_space<vmem>>) attributes {dimension_semantics = [#tpu.dimension_semantics<parallel>], iteration_bounds = array<i64: 1>, scalar_prefetch = 0 : i64, scratch_operands = 0 : i64, tpu.core_type = #tpu.core_type<tc>, window_params = [{transform_indices = @transform_0, window_bounds = array<i64: 1, 8, 32>}, {transform_indices = @transform_1, window_bounds = array<i64: 1, 8, 4>}, {pipeline_mode = #tpu.pipeline_mode<synchronous>, transform_indices = @transform_2, window_bounds = array<i64: 40, 384>}, {transform_indices = @transform_3, window_bounds = array<i64: 1, 8, 128>}]} {
    %c0 = arith.constant 0 : index
    %c0_0 = arith.constant 0 : index
    %0 = vector.load %arg3[%c0, %c0_0] : memref<40x384xf32, #tpu.memory_space<vmem>>, vector<32x256xf32>
    %c32 = arith.constant 32 : index
    %c0_1 = arith.constant 0 : index
    %1 = vector.load %arg3[%c32, %c0_1] : memref<40x384xf32, #tpu.memory_space<vmem>>, vector<1x256xf32>
    %c0_2 = arith.constant 0 : index
    %c256 = arith.constant 256 : index
    %2 = vector.load %arg3[%c0_2, %c256] : memref<40x384xf32, #tpu.memory_space<vmem>>, vector<32x32xf32>
    %c32_3 = arith.constant 32 : index
    %c256_4 = arith.constant 256 : index
    %3 = vector.load %arg3[%c32_3, %c256_4] : memref<40x384xf32, #tpu.memory_space<vmem>>, vector<1x32xf32>
    %c33 = arith.constant 33 : index
    %c0_5 = arith.constant 0 : index
    %4 = vector.load %arg3[%c33, %c0_5] : memref<40x384xf32, #tpu.memory_space<vmem>>, vector<1x2xf32>
    %c34 = arith.constant 34 : index
    %c0_6 = arith.constant 0 : index
    %5 = vector.load %arg3[%c34, %c0_6] : memref<40x384xf32, #tpu.memory_space<vmem>>, vector<4x256xf32>
    %c38 = arith.constant 38 : index
    %c0_7 = arith.constant 0 : index
    %6 = vector.load %arg3[%c38, %c0_7] : memref<40x384xf32, #tpu.memory_space<vmem>>, vector<2x256xf32>
    %c0_8 = arith.constant 0 : index
    %c0_9 = arith.constant 0 : index
    %c0_10 = arith.constant 0 : index
    %7 = vector.load %arg1[%c0_8, %c0_9, %c0_10] : memref<1x8x32xf32, #tpu.memory_space<vmem>>, vector<1x8x32xf32>
    %8 = vector.shape_cast %7 : vector<1x8x32xf32> to vector<8x32xf32>
    %c0_11 = arith.constant 0 : index
    %c0_12 = arith.constant 0 : index
    %c0_13 = arith.constant 0 : index
    %9 = vector.load %arg2[%c0_11, %c0_12, %c0_13] : memref<1x8x4xf32, #tpu.memory_space<vmem>>, vector<1x8x4xf32>
    %10 = vector.shape_cast %9 : vector<1x8x4xf32> to vector<8x4xf32>
    %cst = arith.constant dense<0.000000e+00> : vector<8x32xf32>
    %11 = tpu.matmul %8, %2, %cst {dimension_numbers = #tpu.dot_dimension_numbers<[1], [0], [0], [1], [0, 0, 1, 1], [], []>} : vector<8x32xf32>, vector<32x32xf32>, vector<8x32xf32> -> vector<8x32xf32>
    %12 = vector.broadcast %3 : vector<1x32xf32> to vector<8x32xf32>
    %13 = arith.addf %11, %12 : vector<8x32xf32>
    %cst_14 = arith.constant 0.000000e+00 : f32
    %14 = vector.broadcast %cst_14 : f32 to vector<8x32xf32>
    %15 = arith.maximumf %13, %14 : vector<8x32xf32>
    %cst_15 = arith.constant dense<0.000000e+00> : vector<8x256xf32>
    %16 = tpu.matmul %15, %0, %cst_15 {dimension_numbers = #tpu.dot_dimension_numbers<[1], [0], [0], [1], [0, 0, 1, 1], [], []>} : vector<8x32xf32>, vector<32x256xf32>, vector<8x256xf32> -> vector<8x256xf32>
    %17 = vector.broadcast %1 : vector<1x256xf32> to vector<8x256xf32>
    %18 = arith.addf %16, %17 : vector<8x256xf32>
    %19 = vector.extract_strided_slice %18 {offsets = [0, 0], sizes = [8, 128], strides = [1, 1]} : vector<8x256xf32> to vector<8x128xf32>
    %20 = math.tanh %19 : vector<8x128xf32>
    %21 = vector.extract_strided_slice %18 {offsets = [0, 128], sizes = [8, 128], strides = [1, 1]} : vector<8x256xf32> to vector<8x128xf32>
    %cst_16 = arith.constant dense<0xFF800000> : vector<4xf32>
    %22 = vector.multi_reduction <maximumf>, %10, %cst_16 [0] : vector<8x4xf32> to vector<4xf32>
    %23 = vector.shape_cast %22 : vector<4xf32> to vector<1x4xf32>
    %24 = tpu.iota {dimensions = array<i32: 0>} : vector<8x4xi32>
    %25 = vector.broadcast %23 : vector<1x4xf32> to vector<8x4xf32>
    %26 = arith.cmpf oeq, %10, %25 : vector<8x4xf32>
    %c8_i32 = arith.constant 8 : i32
    %27 = vector.broadcast %c8_i32 : i32 to vector<8x4xi32>
    %28 = arith.select %26, %24, %27 : vector<8x4xi1>, vector<8x4xi32>
    %cst_17 = arith.constant dense<2147483647> : vector<4xi32>
    %29 = vector.multi_reduction <minsi>, %28, %cst_17 [0] : vector<8x4xi32> to vector<4xi32>
    %30 = vector.shape_cast %29 : vector<4xi32> to vector<1x4xi32>
    %31 = vector.broadcast %30 : vector<1x4xi32> to vector<8x4xi32>
    %32 = arith.cmpi eq, %24, %31 : vector<8x4xi32>
    %33 = arith.extui %32 : vector<8x4xi1> to vector<8x4xi32>
    %34 = arith.sitofp %33 : vector<8x4xi32> to vector<8x4xf32>
    %cst_18 = arith.constant dense<0.000000e+00> : vector<4x128xf32>
    %35 = tpu.matmul %34, %20, %cst_18 {dimension_numbers = #tpu.dot_dimension_numbers<[0], [0], [1], [1], [0, 1, 1, 1], [], []>} : vector<8x4xf32>, vector<8x128xf32>, vector<4x128xf32> -> vector<4x128xf32>
    %cst_19 = arith.constant dense<0.000000e+00> : vector<8x4xf32>
    %36 = tpu.matmul %20, %35, %cst_19 {dimension_numbers = #tpu.dot_dimension_numbers<[1], [1], [0], [0], [0, 0, 1, 0], [], []>} : vector<8x128xf32>, vector<4x128xf32>, vector<8x4xf32> -> vector<8x4xf32>
    %cst_20 = arith.constant 1.280000e+02 : f32
    %37 = math.sqrt %cst_20 : f32
    %cst_21 = arith.constant 1.000000e+00 : f32
    %38 = arith.divf %cst_21, %37 : f32
    %39 = vector.broadcast %38 : f32 to vector<8x4xf32>
    %40 = arith.mulf %36, %39 : vector<8x4xf32>
    %cst_22 = arith.constant dense<0xFF800000> : vector<4xf32>
    %41 = vector.multi_reduction <maximumf>, %40, %cst_22 [0] : vector<8x4xf32> to vector<4xf32>
    %42 = vector.shape_cast %41 : vector<4xf32> to vector<1x4xf32>
    %43 = vector.broadcast %42 : vector<1x4xf32> to vector<8x4xf32>
    %44 = arith.subf %40, %43 : vector<8x4xf32>
    %45 = math.exp %44 : vector<8x4xf32>
    %cst_23 = arith.constant dense<0.000000e+00> : vector<4xf32>
    %46 = vector.multi_reduction <add>, %45, %cst_23 [0] : vector<8x4xf32> to vector<4xf32>
    %47 = vector.shape_cast %46 : vector<4xf32> to vector<1x4xf32>
    %48 = vector.broadcast %47 : vector<1x4xf32> to vector<8x4xf32>
    %49 = arith.divf %45, %48 : vector<8x4xf32>
    %cst_24 = arith.constant dense<0.000000e+00> : vector<8x256xf32>
    %50 = tpu.matmul %49, %5, %cst_24 {dimension_numbers = #tpu.dot_dimension_numbers<[1], [0], [0], [1], [0, 0, 1, 1], [], []>} : vector<8x4xf32>, vector<4x256xf32>, vector<8x256xf32> -> vector<8x256xf32>
    %51 = tpu.concatenate %21, %21 in 1 : vector<8x128xf32>, vector<8x128xf32> -> vector<8x256xf32>
    %52 = arith.mulf %50, %51 : vector<8x256xf32>
    %cst_25 = arith.constant 1.000000e+00 : f32
    %53 = vector.broadcast %cst_25 : f32 to vector<1x8xf32>
    %cst_26 = arith.constant dense<0.000000e+00> : vector<1x256xf32>
    %54 = tpu.matmul %53, %52, %cst_26 {dimension_numbers = #tpu.dot_dimension_numbers<[1], [0], [0], [1], [0, 0, 1, 1], [], []>} : vector<1x8xf32>, vector<8x256xf32>, vector<1x256xf32> -> vector<1x256xf32>
    %cst_27 = arith.constant dense<0.000000e+00> : vector<1x2xf32>
    %55 = tpu.matmul %54, %6, %cst_27 {dimension_numbers = #tpu.dot_dimension_numbers<[1], [1], [0], [0], [0, 0, 1, 0], [], []>} : vector<1x256xf32>, vector<2x256xf32>, vector<1x2xf32> -> vector<1x2xf32>
    %56 = arith.addf %55, %4 : vector<1x2xf32>
    %57 = tpu.iota {dimensions = array<i32: 1>} : vector<1x2xi32>
    %cst_28 = arith.constant dense<0xFF800000> : vector<1xf32>
    %58 = vector.multi_reduction <maximumf>, %56, %cst_28 [1] : vector<1x2xf32> to vector<1xf32>
    %59 = vector.shape_cast %58 : vector<1xf32> to vector<1x1xf32>
    %60 = vector.broadcast %59 : vector<1x1xf32> to vector<1x2xf32>
    %61 = arith.cmpf oeq, %56, %60 : vector<1x2xf32>
    %c2_i32 = arith.constant 2 : i32
    %62 = vector.broadcast %c2_i32 : i32 to vector<1x2xi32>
    %63 = arith.select %61, %57, %62 : vector<1x2xi1>, vector<1x2xi32>
    %cst_29 = arith.constant dense<2147483647> : vector<1xi32>
    %64 = vector.multi_reduction <minsi>, %63, %cst_29 [1] : vector<1x2xi32> to vector<1xi32>
    %65 = vector.shape_cast %64 : vector<1xi32> to vector<1x1xi32>
    %66 = arith.sitofp %65 : vector<1x1xi32> to vector<1x1xf32>
    %cst_30 = arith.constant 0.000000e+00 : f32
    %67 = vector.broadcast %cst_30 : f32 to vector<1x121xf32>
    %68 = tpu.concatenate %56, %66, %67 in 1 : vector<1x2xf32>, vector<1x1xf32>, vector<1x121xf32> -> vector<1x124xf32>
    %cst_31 = arith.constant 0.000000e+00 : f32
    %69 = vector.broadcast %cst_31 : f32 to vector<7x124xf32>
    %70 = tpu.concatenate %68, %69 in 0 : vector<1x124xf32>, vector<7x124xf32> -> vector<8x124xf32>
    %71 = tpu.concatenate %49, %70 in 1 : vector<8x4xf32>, vector<8x124xf32> -> vector<8x128xf32>
    %c0_32 = arith.constant 0 : index
    %c0_33 = arith.constant 0 : index
    %c0_34 = arith.constant 0 : index
    %72 = vector.load %arg4[%c0_32, %c0_33, %c0_34] : memref<1x8x128xf32, #tpu.memory_space<vmem>>, vector<1x8x128xf32>
    %73 = vector.shape_cast %72 : vector<1x8x128xf32> to vector<8x128xf32>
    %74 = vector.shape_cast %71 : vector<8x128xf32> to vector<1x8x128xf32>
    tpu.vector_store %arg4[%c0_32, %c0_33, %c0_34], %74 {strides = array<i32>} : memref<1x8x128xf32, #tpu.memory_space<vmem>>, vector<1x8x128xf32>,
    return
  }
  func.func @transform_0(%arg0: i32) -> (i32, i32, i32) {
    %c0_i32 = arith.constant 0 : i32
    %c0_i32_0 = arith.constant 0 : i32
    %c0_i32_1 = arith.constant 0 : i32
    return %arg0, %c0_i32, %c0_i32_0 : i32, i32, i32
  }
  func.func @transform_1(%arg0: i32) -> (i32, i32, i32) {
    %c0_i32 = arith.constant 0 : i32
    %c0_i32_0 = arith.constant 0 : i32
    %c0_i32_1 = arith.constant 0 : i32
    return %arg0, %c0_i32, %c0_i32_0 : i32, i32, i32
  }
  func.func @transform_2(%arg0: i32) -> (i32, i32) {
    %c0_i32 = arith.constant 0 : i32
    %c0_i32_0 = arith.constant 0 : i32
    %c0_i32_1 = arith.constant 0 : i32
    return %c0_i32, %c0_i32_0 : i32, i32
  }
  func.func @transform_3(%arg0: i32) -> (i32, i32, i32) {
    %c0_i32 = arith.constant 0 : i32
    %c0_i32_0 = arith.constant 0 : i32
    %c0_i32_1 = arith.constant 0 : i32
    return %arg0, %c0_i32, %c0_i32_0 : i32, i32, i32
  }
}

</mosaic_0001>

<llo_original>
// kernel: bclassifier_forward.1
$region0: #{bclassifier_forward.1}
  #allocation0 [shape = 'u32[]', space=smem, size = 0x4, offset = 0x4, fixed_abs, tag = 'smem constant byte address 0x4 - core index']
  #allocation1 [shape = 'u32[144,128]{1,0:T(1,128)}', space=vmem, size = 0x12000, scoped, tag = 'internal scratch']
  %s0 = inlined_call_operand.vmem [shape: f32[1,8,32], index: 0, kind: input, shape index: {}]
  %s1 = inlined_call_operand.vmem [shape: f32[1,8,4], index: 1, kind: input, shape index: {}]
  %s2 = inlined_call_operand.hbm [shape: f32[40,384], index: 2, kind: input, shape index: {}]
  %s3 = inlined_call_operand.vmem [shape: f32[1,8,128], index: 3, kind: output, shape index: {}]
  %s4 = sld [smem:[#allocation0]]
  $region26: #{bclassifier_forward.1} parent=0
    _
  %s6 = ssub.s32 1, %s4
  %s7 = scalar_select 0, %s6, %s4
  $region1: #{bclassifier_forward.1} parent=0
    #allocation2 [shape = 'u8[61440]{0}', space=vmem, size = 0xf000, scoped, tag = 'input window, operand 2, single buffered']
    #allocation3 [shape = 's32[1]{0}', space=sflag, size = 0x4, scoped, tag = 'scoped memory for bclassifier_forward.1']
    %8 = vsyncpa [#allocation3], 0
    // Predicated region
    $region2: #{bclassifier_forward.1} parent=1 // pred_check
      _
    $region3: #{bclassifier_forward.1} parent=1 // pred_check_branch
      %10 = sbr.rel (0) target = $region5
    $region4: #{bclassifier_forward.1} parent=1 // pred_region
      _
    $region5: #{bclassifier_forward.1} parent=1 // pred_fallthru
      _
    // Predicated region
    $region6: #{bclassifier_forward.1} parent=1 // pred_check
      _
    $region7: #{bclassifier_forward.1} parent=1 // pred_check_branch
      %12 = sbr.rel (0) target = $region9
    $region8: #{bclassifier_forward.1} parent=1 // pred_region
      _
    $region9: #{bclassifier_forward.1} parent=1 // pred_fallthru
      _
    // Predicated region
    $region10: #{bclassifier_forward.1} parent=1 // pred_check
      _
    $region11: #{bclassifier_forward.1} parent=1 // pred_check_branch
      %14 = sbr.rel (0) target = $region13
    $region12: #{bclassifier_forward.1} parent=1 // pred_region
      %s16 = ssub.s32 1920, 1920
      %17 = vsyncadd [#allocation3], %s16
      %s18 = sshll.u32 [#allocation2], 4
      %s19 = int_to_ptr.vmem [resolvable:$true] %s18
      %24 = dma.hbm_to_vmem [thread:$0]  %s2, 1920, %s19, [#allocation3], 384, 384, 24
    $region13: #{bclassifier_forward.1} parent=1 // pred_fallthru
      _
    // Predicated region
    $region14: #{bclassifier_forward.1} parent=1 // pred_check
      _
    $region15: #{bclassifier_forward.1} parent=1 // pred_check_branch
      %26 = sbr.rel (0) target = $region17
    $region16: #{bclassifier_forward.1} parent=1 // pred_region
      %27 = dma.done [#allocation3], 1920
    $region17: #{bclassifier_forward.1} parent=1 // pred_fallthru
      _
    %v28 = vld [vmem:[#allocation2] sm:$0xff]
    %v29 = vld [vmem:[#allocation2 + $0x8] sm:$0xff]
    %v30 = vld [vmem:[#allocation2 + $0x18] sm:$0xff]
    %v31 = vld [vmem:[#allocation2 + $0x20] sm:$0xff]
    %v32 = vld [vmem:[#allocation2 + $0x30] sm:$0xff]
    %v33 = vld [vmem:[#allocation2 + $0x38] sm:$0xff]
    %v34 = vld [vmem:[#allocation2 + $0x48] sm:$0xff]
    %v35 = vld [vmem:[#allocation2 + $0x50] sm:$0xff]
    %s36 = scalar_lea.vmem [#allocation2], 96
    %v37 = vld [vmem:[%s36] ss:$8 sm:$0x3]
    %v38 = vld [vmem:[#allocation2 + $0x10] sm:$0xff]
    %v39 = vld [vmem:[#allocation2 + $0x28] sm:$0xff]
    %v40 = vld [vmem:[#allocation2 + $0x40] sm:$0xff]
    %v41 = vld [vmem:[#allocation2 + $0x58] sm:$0xff]
    %v42 = vld [vmem:[#allocation2 + $0x70] ss:$0 sm:$0xff]
    %v43 = vld [vmem:[#allocation2 + $0x61] ss:$0 sm:$0xff]
    %v44 = vld [vmem:[#allocation2 + $0x60] sm:$0x3c]
    %v45 = vld [vmem:[#allocation2 + $0x68] sm:$0x3c]
    %v46 = vld [vmem:[#allocation2 + $0x60] sm:$0xc0]
    %v47 = vld [vmem:[#allocation2 + $0x68] sm:$0xc0]
    %v48 = vld [vmem:[%s0] sm:$0xff]
    %v49 = vld [vmem:[%s1] sm:$0xff]
    %vm50 = vcmask 261120
    %v52 = vsel %vm50, %v48, 0
    %54 = vmatprep.subr.mxu0 0.0
    %55 = vmatpush1.msra.mxu0 0.0
    %56 = vmatprep.subr.mxu0 0.0
    %57 = vmatpush1.msra.mxu0 0.0
    %58 = vmatprep.subr.mxu0 0.0
    %59 = vmatpush1.msra.mxu0 0.0
    %60 = vmatprep.subr.mxu0 0.0
    %61 = vmatpush1.msra.mxu0 0.0
    %62 = vmatprep.subr.mxu0 0.0
    %63 = vmatpush1.msra.mxu0 0.0
    %64 = vmatprep.subr.mxu0 0.0
    %65 = vmatpush1.msra.mxu0 0.0
    %66 = vmatprep.subr.mxu0 0.0
    %67 = vmatpush1.msra.mxu0 0.0
    %68 = vmatprep.subr.mxu0 0.0
    %69 = vmatpush1.msra.mxu0 0.0
    %70 = vmatprep.subr.mxu0 0.0
    %71 = vmatpush1.msra.mxu0 0.0
    %72 = vmatprep.subr.mxu0 0.0
    %73 = vmatpush1.msra.mxu0 0.0
    %74 = vmatprep.subr.mxu0 0.0
    %75 = vmatpush1.msra.mxu0 0.0
    %76 = vmatprep.subr.mxu0 0.0
    %77 = vmatpush1.msra.mxu0 0.0
    %78 = vmatprep.subr.mxu0 0.0
    %79 = vmatpush1.msra.mxu0 %v41
    %80 = vmatprep.subr.mxu0 0.0
    %81 = vmatpush1.msra.mxu0 %v40
    %82 = vmatprep.subr.mxu0 0.0
    %83 = vmatpush1.msra.mxu0 %v39
    %84 = vmatprep.subr.mxu0 0.0
    %85 = vmatpush1.msra.mxu0 %v38
    %86 = vmatprep.subr.mxu0 0.0
    %87 = vmatpush2.msra.mxu0 0.0
    %88 = vmatprep.subr.mxu0 0.0
    %89 = vmatpush2.msra.mxu0 0.0
    %90 = vmatprep.subr.mxu0 0.0
    %91 = vmatpush2.msra.mxu0 0.0
    %92 = vmatprep.subr.mxu0 0.0
    %93 = vmatpush2.msra.mxu0 0.0
    %94 = vmatprep.subr.mxu0 0.0
    %95 = vmatpush2.msra.mxu0 0.0
    %96 = vmatprep.subr.mxu0 0.0
    %97 = vmatpush2.msra.mxu0 0.0
    %98 = vmatprep.subr.mxu0 0.0
    %99 = vmatpush2.msra.mxu0 0.0
    %100 = vmatprep.subr.mxu0 0.0
    %101 = vmatpush2.msra.mxu0 0.0
    %102 = vmatprep.subr.mxu0 0.0
    %103 = vmatpush2.msra.mxu0 0.0
    %104 = vmatprep.subr.mxu0 0.0
    %105 = vmatpush2.msra.mxu0 0.0
    %106 = vmatprep.subr.mxu0 0.0
    %107 = vmatpush2.msra.mxu0 0.0
    %108 = vmatprep.subr.mxu0 0.0
    %109 = vmatpush2.msra.mxu0 0.0
    %110 = vmatprep.subr.mxu0 0.0
    %111 = vmatpush2.msra.mxu0 0.0
    %112 = vmatprep.subr.mxu0 0.0
    %113 = vmatpush2.msra.mxu0 0.0
    %114 = vmatprep.subr.mxu0 0.0
    %115 = vmatpush2.msra.mxu0 0.0
    %116 = vmatprep.subr.mxu0 0.0
    %117 = vmatpush2.msra.mxu0 0.0
    %118 = vmatprep.mubr.f32.mxu0 0.0
    %119 = vmatmul.mubr.f32.gmra.mxu0 %v52
    %v120 = vpop.f32.mrf.mxu0
    %v121 = vadd.f32 %v42, %v120
    %v122 = vpop.f32.mrf.mxu0
    %123 = vdwg.mxu0
    %v124 = vmax.f32 %v121, 0.0
    %v126 = vlaneseq
    %v127 = vshrl.u32 %v126, 7
    %v128 = vsub.s32 0, %v127
    %v129 = vrot.slane %v37, %v128
    %v130 = vlaneseq
    %v131 = vshrl.u32 %v130, 7
    %v132 = vsub.s32 1, %v131
    %v133 = vrot.slane %v37, %v132
    %v137 = vsel %vm50, %v124, 0
    %139 = vmatprep.subr.mxu0 0.0
    %140 = vmatpush1.msra.mxu0 0.0
    %141 = vmatprep.subr.mxu0 0.0
    %142 = vmatpush1.msra.mxu0 0.0
    %143 = vmatprep.subr.mxu0 0.0
    %144 = vmatpush1.msra.mxu0 0.0
    %145 = vmatprep.subr.mxu0 0.0
    %146 = vmatpush1.msra.mxu0 0.0
    %147 = vmatprep.subr.mxu0 0.0
    %148 = vmatpush1.msra.mxu0 0.0
    %149 = vmatprep.subr.mxu0 0.0
    %150 = vmatpush1.msra.mxu0 0.0
    %151 = vmatprep.subr.mxu0 0.0
    %152 = vmatpush1.msra.mxu0 0.0
    %153 = vmatprep.subr.mxu0 0.0
    %154 = vmatpush1.msra.mxu0 0.0
    %155 = vmatprep.subr.mxu0 0.0
    %156 = vmatpush1.msra.mxu0 0.0
    %157 = vmatprep.subr.mxu0 0.0
    %158 = vmatpush1.msra.mxu0 0.0
    %159 = vmatprep.subr.mxu0 0.0
    %160 = vmatpush1.msra.mxu0 0.0
    %161 = vmatprep.subr.mxu0 0.0
    %162 = vmatpush1.msra.mxu0 0.0
    %163 = vmatprep.subr.mxu0 %v35
    %164 = vmatpush1.msra.mxu0 %v34
    %165 = vmatprep.subr.mxu0 %v33
    %166 = vmatpush1.msra.mxu0 %v32
    %167 = vmatprep.subr.mxu0 %v31
    %168 = vmatpush1.msra.mxu0 %v30
    %169 = vmatprep.subr.mxu0 %v29
    %170 = vmatpush1.msra.mxu0 %v28
    %171 = vmatprep.subr.mxu0 0.0
    %172 = vmatpush2.msra.mxu0 0.0
    %173 = vmatprep.subr.mxu0 0.0
    %174 = vmatpush2.msra.mxu0 0.0
    %175 = vmatprep.subr.mxu0 0.0
    %176 = vmatpush2.msra.mxu0 0.0
    %177 = vmatprep.subr.mxu0 0.0
    %178 = vmatpush2.msra.mxu0 0.0
    %179 = vmatprep.subr.mxu0 0.0
    %180 = vmatpush2.msra.mxu0 0.0
    %181 = vmatprep.subr.mxu0 0.0
    %182 = vmatpush2.msra.mxu0 0.0
    %183 = vmatprep.subr.mxu0 0.0
    %184 = vmatpush2.msra.mxu0 0.0
    %185 = vmatprep.subr.mxu0 0.0
    %186 = vmatpush2.msra.mxu0 0.0
    %187 = vmatprep.subr.mxu0 0.0
    %188 = vmatpush2.msra.mxu0 0.0
    %189 = vmatprep.subr.mxu0 0.0
    %190 = vmatpush2.msra.mxu0 0.0
    %191 = vmatprep.subr.mxu0 0.0
    %192 = vmatpush2.msra.mxu0 0.0
    %193 = vmatprep.subr.mxu0 0.0
    %194 = vmatpush2.msra.mxu0 0.0
    %195 = vmatprep.subr.mxu0 0.0
    %196 = vmatpush2.msra.mxu0 0.0
    %197 = vmatprep.subr.mxu0 0.0
    %198 = vmatpush2.msra.mxu0 0.0
    %199 = vmatprep.subr.mxu0 0.0
    %200 = vmatpush2.msra.mxu0 0.0
    %201 = vmatprep.subr.mxu0 0.0
    %202 = vmatpush2.msra.mxu0 0.0
    %203 = vmatprep.mubr.f32.mxu0 0.0
    %204 = vmatmul.mubr.f32.gmra.mxu0 %v137
    %v205 = vpop.f32.mrf.mxu0
    %v206 = vadd.f32 %v129, %v205
    %v207 = vpop.f32.mrf.mxu0
    %v208 = vadd.f32 %v133, %v207
    %209 = vdwg.mxu0
    %v210 = vtanh.pop %v206
    %vm211 = vcmask 31744
    %v212 = vsel %vm211, %v49, -inf
    %v213 = vrot.slane %v212, 4
    %v214 = vmax.f32 %v212, %v213
    %v215 = vrot.slane %v214, 2
    %v216 = vmax.f32 %v214, %v215
    %v217 = vrot.slane %v216, 1
    %v218 = vmax.f32 %v216, %v217
    %v219 = vlaneseq
    %v220 = vshrl.u32 %v219, 7
    %vm221 = vcmp.eq.f32.partialorder %v49, %v218
    %v222 = vsel %vm221, %v220, 8
    %v223 = vsel %vm211, %v222, 2147483647
    %v224 = vrot.slane %v223, 4
    %vm225 = vcmp.lt.s32.totalorder %v223, %v224
    %v226 = vsel %vm225, %v223, %v224
    %v227 = vrot.slane %v226, 2
    %vm228 = vcmp.lt.s32.totalorder %v226, %v227
    %v229 = vsel %vm228, %v226, %v227
    %v230 = vrot.slane %v229, 1
    %vm231 = vcmp.lt.s32.totalorder %v229, %v230
    %v232 = vsel %vm231, %v229, %v230
    %vm233 = vcmp.eq.s32.totalorder %v220, %v232
    %v234 = vsel %vm233, 1, 0
    %v235 = vcvt.s32.f32 %v234
    %236 = vxpose.xlu0.b32.start [1/16] %v235, 128
    %237 = vxpose.xlu0.b32.cont [2/16] 0.0, 128
    %238 = vxpose.xlu0.b32.cont [3/16] 0.0, 128
    %239 = vxpose.xlu0.b32.cont [4/16] 0.0, 128
    %240 = vxpose.xlu0.b32.cont [5/16] 0.0, 128
    %241 = vxpose.xlu0.b32.cont [6/16] 0.0, 128
    %242 = vxpose.xlu0.b32.cont [7/16] 0.0, 128
    %243 = vxpose.xlu0.b32.cont [8/16] 0.0, 128
    %244 = vxpose.xlu0.b32.cont [9/16] 0.0, 128
    %245 = vxpose.xlu0.b32.cont [10/16] 0.0, 128
    %246 = vxpose.xlu0.b32.cont [11/16] 0.0, 128
    %247 = vxpose.xlu0.b32.cont [12/16] 0.0, 128
    %248 = vxpose.xlu0.b32.cont [13/16] 0.0, 128
    %249 = vxpose.xlu0.b32.cont [14/16] 0.0, 128
    %250 = vxpose.xlu0.b32.cont [15/16] 0.0, 128
    %251 = vxpose.xlu0.b32.end [16/16] 0.0, 128
    %v252 = vpop.trf.xlu0
    %v253 = vpop.trf.xlu0
    %v254 = vpop.trf.xlu0
    %v255 = vpop.trf.xlu0
    %v256 = vpop.trf.xlu0
    %v257 = vpop.trf.xlu0
    %v258 = vpop.trf.xlu0
    %v259 = vpop.trf.xlu0
    %v260 = vpop.trf.xlu0
    %v261 = vpop.trf.xlu0
    %v262 = vpop.trf.xlu0
    %v263 = vpop.trf.xlu0
    %v264 = vpop.trf.xlu0
    %v265 = vpop.trf.xlu0
    %v266 = vpop.trf.xlu0
    %v267 = vpop.trf.xlu0
    %vm268 = vcmask 64512
    %v270 = vsel %vm268, %v252, 0
    %272 = vmatprep.subr.mxu0 0.0
    %273 = vmatpush1.msra.mxu0 0.0
    %274 = vmatprep.subr.mxu0 0.0
    %275 = vmatpush1.msra.mxu0 0.0
    %276 = vmatprep.subr.mxu0 0.0
    %277 = vmatpush1.msra.mxu0 0.0
    %278 = vmatprep.subr.mxu0 0.0
    %279 = vmatpush1.msra.mxu0 0.0
    %280 = vmatprep.subr.mxu0 0.0
    %281 = vmatpush1.msra.mxu0 0.0
    %282 = vmatprep.subr.mxu0 0.0
    %283 = vmatpush1.msra.mxu0 0.0
    %284 = vmatprep.subr.mxu0 0.0
    %285 = vmatpush1.msra.mxu0 0.0
    %286 = vmatprep.subr.mxu0 0.0
    %287 = vmatpush1.msra.mxu0 0.0
    %288 = vmatprep.subr.mxu0 0.0
    %289 = vmatpush1.msra.mxu0 0.0
    %290 = vmatprep.subr.mxu0 0.0
    %291 = vmatpush1.msra.mxu0 0.0
    %292 = vmatprep.subr.mxu0 0.0
    %293 = vmatpush1.msra.mxu0 0.0
    %294 = vmatprep.subr.mxu0 0.0
    %295 = vmatpush1.msra.mxu0 0.0
    %296 = vmatprep.subr.mxu0 0.0
    %297 = vmatpush1.msra.mxu0 0.0
    %298 = vmatprep.subr.mxu0 0.0
    %299 = vmatpush1.msra.mxu0 0.0
    %300 = vmatprep.subr.mxu0 0.0
    %301 = vmatpush1.msra.mxu0 0.0
    %302 = vmatprep.subr.mxu0 0.0
    %303 = vmatpush1.msra.mxu0 %v210
    %304 = vmatprep.subr.mxu0 0.0
    %305 = vmatpush2.msra.mxu0 0.0
    %306 = vmatprep.subr.mxu0 0.0
    %307 = vmatpush2.msra.mxu0 0.0
    %308 = vmatprep.subr.mxu0 0.0
    %309 = vmatpush2.msra.mxu0 0.0
    %310 = vmatprep.subr.mxu0 0.0
    %311 = vmatpush2.msra.mxu0 0.0
    %312 = vmatprep.subr.mxu0 0.0
    %313 = vmatpush2.msra.mxu0 0.0
    %314 = vmatprep.subr.mxu0 0.0
    %315 = vmatpush2.msra.mxu0 0.0
    %316 = vmatprep.subr.mxu0 0.0
    %317 = vmatpush2.msra.mxu0 0.0
    %318 = vmatprep.subr.mxu0 0.0
    %319 = vmatpush2.msra.mxu0 0.0
    %320 = vmatprep.subr.mxu0 0.0
    %321 = vmatpush2.msra.mxu0 0.0
    %322 = vmatprep.subr.mxu0 0.0
    %323 = vmatpush2.msra.mxu0 0.0
    %324 = vmatprep.subr.mxu0 0.0
    %325 = vmatpush2.msra.mxu0 0.0
    %326 = vmatprep.subr.mxu0 0.0
    %327 = vmatpush2.msra.mxu0 0.0
    %328 = vmatprep.subr.mxu0 0.0
    %329 = vmatpush2.msra.mxu0 0.0
    %330 = vmatprep.subr.mxu0 0.0
    %331 = vmatpush2.msra.mxu0 0.0
    %332 = vmatprep.subr.mxu0 0.0
    %333 = vmatpush2.msra.mxu0 0.0
    %334 = vmatprep.subr.mxu0 0.0
    %335 = vmatpush2.msra.mxu0 0.0
    %336 = vmatprep.mubr.f32.mxu0 0.0
    %337 = vmatmul.mubr.f32.gmra.mxu0 %v270
    %v338 = vpop.f32.mrf.mxu0
    %v339 = vadd.f32 0.0, %v338
    %v340 = vpop.f32.mrf.mxu0
    %341 = vdwg.mxu0
    %342 = vmatprep.subr.mxu0 0.0
    %343 = vmatpush1.xpose.msra.mxu0 0.0
    %344 = vmatprep.subr.mxu0 0.0
    %345 = vmatpush1.xpose.msra.mxu0 0.0
    %346 = vmatprep.subr.mxu0 0.0
    %347 = vmatpush1.xpose.msra.mxu0 0.0
    %348 = vmatprep.subr.mxu0 0.0
    %349 = vmatpush1.xpose.msra.mxu0 0.0
    %350 = vmatprep.subr.mxu0 0.0
    %351 = vmatpush1.xpose.msra.mxu0 0.0
    %352 = vmatprep.subr.mxu0 0.0
    %353 = vmatpush1.xpose.msra.mxu0 0.0
    %354 = vmatprep.subr.mxu0 0.0
    %355 = vmatpush1.xpose.msra.mxu0 0.0
    %356 = vmatprep.subr.mxu0 0.0
    %357 = vmatpush1.xpose.msra.mxu0 0.0
    %358 = vmatprep.subr.mxu0 0.0
    %359 = vmatpush1.xpose.msra.mxu0 0.0
    %360 = vmatprep.subr.mxu0 0.0
    %361 = vmatpush1.xpose.msra.mxu0 0.0
    %362 = vmatprep.subr.mxu0 0.0
    %363 = vmatpush1.xpose.msra.mxu0 0.0
    %364 = vmatprep.subr.mxu0 0.0
    %365 = vmatpush1.xpose.msra.mxu0 0.0
    %366 = vmatprep.subr.mxu0 0.0
    %367 = vmatpush1.xpose.msra.mxu0 0.0
    %368 = vmatprep.subr.mxu0 0.0
    %369 = vmatpush1.xpose.msra.mxu0 0.0
    %370 = vmatprep.subr.mxu0 0.0
    %371 = vmatpush1.xpose.msra.mxu0 0.0
    %372 = vmatprep.subr.mxu0 0.0
    %373 = vmatpush1.xpose.msra.mxu0 %v339
    %374 = vmatprep.subr.mxu0 0.0
    %375 = vmatpush2.xpose.msra.mxu0 0.0
    %376 = vmatprep.subr.mxu0 0.0
    %377 = vmatpush2.xpose.msra.mxu0 0.0
    %378 = vmatprep.subr.mxu0 0.0
    %379 = vmatpush2.xpose.msra.mxu0 0.0
    %380 = vmatprep.subr.mxu0 0.0
    %381 = vmatpush2.xpose.msra.mxu0 0.0
    %382 = vmatprep.subr.mxu0 0.0
    %383 = vmatpush2.xpose.msra.mxu0 0.0
    %384 = vmatprep.subr.mxu0 0.0
    %385 = vmatpush2.xpose.msra.mxu0 0.0
    %386 = vmatprep.subr.mxu0 0.0
    %387 = vmatpush2.xpose.msra.mxu0 0.0
    %388 = vmatprep.subr.mxu0 0.0
    %389 = vmatpush2.xpose.msra.mxu0 0.0
    %390 = vmatprep.subr.mxu0 0.0
    %391 = vmatpush2.xpose.msra.mxu0 0.0
    %392 = vmatprep.subr.mxu0 0.0
    %393 = vmatpush2.xpose.msra.mxu0 0.0
    %394 = vmatprep.subr.mxu0 0.0
    %395 = vmatpush2.xpose.msra.mxu0 0.0
    %396 = vmatprep.subr.mxu0 0.0
    %397 = vmatpush2.xpose.msra.mxu0 0.0
    %398 = vmatprep.subr.mxu0 0.0
    %399 = vmatpush2.xpose.msra.mxu0 0.0
    %400 = vmatprep.subr.mxu0 0.0
    %401 = vmatpush2.xpose.msra.mxu0 0.0
    %402 = vmatprep.subr.mxu0 0.0
    %403 = vmatpush2.xpose.msra.mxu0 0.0
    %404 = vmatprep.subr.mxu0 0.0
    %405 = vmatpush2.xpose.msra.mxu0 0.0
    %406 = vmatprep.mubr.f32.mxu0 0.0
    %407 = vmatmul.mubr.f32.gmra.mxu0 %v210
    %v408 = vpop.f32.mrf.mxu0
    %v409 = vadd.f32 0.0, %v408
    %v410 = vpop.f32.mrf.mxu0
    %411 = vdwg.mxu0
    %v412 = vmul.f32 %v409, 0.088388346
    %v413 = vsel %vm211, %v412, -inf
    %v414 = vrot.slane %v413, 4
    %v415 = vmax.f32 %v413, %v414
    %v416 = vrot.slane %v415, 2
    %v417 = vmax.f32 %v415, %v416
    %v418 = vrot.slane %v417, 1
    %v419 = vmax.f32 %v417, %v418
    %v420 = vsub.f32 %v412, %v419
    %v421 = vmul.f32 %v420, 1.442695
    %v422 = vpow.pop %v421
    %v423 = vsel %vm211, %v422, 0.0
    %v424 = vrot.slane %v423, 4
    %v425 = vadd.f32 %v423, %v424
    %v426 = vrot.slane %v425, 2
    %v427 = vadd.f32 %v425, %v426
    %v428 = vrot.slane %v427, 1
    %v429 = vadd.f32 %v427, %v428
    %v430 = vrcp.pop %v429
    %v431 = vmul.f32 %v422, %v430
    %v434 = vrot.slane %v44, 2
    %v435 = vrot.slane %v45, 2
    %v437 = vsel %vm211, %v431, 0
    %vm439 = vcmask 1043456
    %v440 = vsel %vm439, %v434, 0
    %v442 = vsel %vm439, %v435, 0
    %444 = vmatprep.subr.mxu0 0.0
    %445 = vmatpush1.msra.mxu0 0.0
    %446 = vmatprep.subr.mxu0 0.0
    %447 = vmatpush1.msra.mxu0 0.0
    %448 = vmatprep.subr.mxu0 0.0
    %449 = vmatpush1.msra.mxu0 0.0
    %450 = vmatprep.subr.mxu0 0.0
    %451 = vmatpush1.msra.mxu0 0.0
    %452 = vmatprep.subr.mxu0 0.0
    %453 = vmatpush1.msra.mxu0 0.0
    %454 = vmatprep.subr.mxu0 0.0
    %455 = vmatpush1.msra.mxu0 0.0
    %456 = vmatprep.subr.mxu0 0.0
    %457 = vmatpush1.msra.mxu0 0.0
    %458 = vmatprep.subr.mxu0 0.0
    %459 = vmatpush1.msra.mxu0 0.0
    %460 = vmatprep.subr.mxu0 0.0
    %461 = vmatpush1.msra.mxu0 0.0
    %462 = vmatprep.subr.mxu0 0.0
    %463 = vmatpush1.msra.mxu0 0.0
    %464 = vmatprep.subr.mxu0 0.0
    %465 = vmatpush1.msra.mxu0 0.0
    %466 = vmatprep.subr.mxu0 0.0
    %467 = vmatpush1.msra.mxu0 0.0
    %468 = vmatprep.subr.mxu0 0.0
    %469 = vmatpush1.msra.mxu0 0.0
    %470 = vmatprep.subr.mxu0 0.0
    %471 = vmatpush1.msra.mxu0 0.0
    %472 = vmatprep.subr.mxu0 0.0
    %473 = vmatpush1.msra.mxu0 0.0
    %474 = vmatprep.subr.mxu0 %v442
    %475 = vmatpush1.msra.mxu0 %v440
    %476 = vmatprep.subr.mxu0 0.0
    %477 = vmatpush2.msra.mxu0 0.0
    %478 = vmatprep.subr.mxu0 0.0
    %479 = vmatpush2.msra.mxu0 0.0
    %480 = vmatprep.subr.mxu0 0.0
    %481 = vmatpush2.msra.mxu0 0.0
    %482 = vmatprep.subr.mxu0 0.0
    %483 = vmatpush2.msra.mxu0 0.0
    %484 = vmatprep.subr.mxu0 0.0
    %485 = vmatpush2.msra.mxu0 0.0
    %486 = vmatprep.subr.mxu0 0.0
    %487 = vmatpush2.msra.mxu0 0.0
    %488 = vmatprep.subr.mxu0 0.0
    %489 = vmatpush2.msra.mxu0 0.0
    %490 = vmatprep.subr.mxu0 0.0
    %491 = vmatpush2.msra.mxu0 0.0
    %492 = vmatprep.subr.mxu0 0.0
    %493 = vmatpush2.msra.mxu0 0.0
    %494 = vmatprep.subr.mxu0 0.0
    %495 = vmatpush2.msra.mxu0 0.0
    %496 = vmatprep.subr.mxu0 0.0
    %497 = vmatpush2.msra.mxu0 0.0
    %498 = vmatprep.subr.mxu0 0.0
    %499 = vmatpush2.msra.mxu0 0.0
    %500 = vmatprep.subr.mxu0 0.0
    %501 = vmatpush2.msra.mxu0 0.0
    %502 = vmatprep.subr.mxu0 0.0
    %503 = vmatpush2.msra.mxu0 0.0
    %504 = vmatprep.subr.mxu0 0.0
    %505 = vmatpush2.msra.mxu0 0.0
    %506 = vmatprep.subr.mxu0 0.0
    %507 = vmatpush2.msra.mxu0 0.0
    %508 = vmatprep.mubr.f32.mxu0 0.0
    %509 = vmatmul.mubr.f32.gmra.mxu0 %v437
    %v510 = vpop.f32.mrf.mxu0
    %v511 = vadd.f32 0.0, %v510
    %v512 = vpop.f32.mrf.mxu0
    %v513 = vadd.f32 0.0, %v512
    %514 = vdwg.mxu0
    %v515 = vmul.f32 %v511, %v208
    %v516 = vmul.f32 %v513, %v208
    %v518 = vsel %vm268, 1.0, 0
    %520 = vmatprep.subr.mxu0 0.0
    %521 = vmatpush1.msra.mxu0 0.0
    %522 = vmatprep.subr.mxu0 0.0
    %523 = vmatpush1.msra.mxu0 0.0
    %524 = vmatprep.subr.mxu0 0.0
    %525 = vmatpush1.msra.mxu0 0.0
    %526 = vmatprep.subr.mxu0 0.0
    %527 = vmatpush1.msra.mxu0 0.0
    %528 = vmatprep.subr.mxu0 0.0
    %529 = vmatpush1.msra.mxu0 0.0
    %530 = vmatprep.subr.mxu0 0.0
    %531 = vmatpush1.msra.mxu0 0.0
    %532 = vmatprep.subr.mxu0 0.0
    %533 = vmatpush1.msra.mxu0 0.0
    %534 = vmatprep.subr.mxu0 0.0
    %535 = vmatpush1.msra.mxu0 0.0
    %536 = vmatprep.subr.mxu0 0.0
    %537 = vmatpush1.msra.mxu0 0.0
    %538 = vmatprep.subr.mxu0 0.0
    %539 = vmatpush1.msra.mxu0 0.0
    %540 = vmatprep.subr.mxu0 0.0
    %541 = vmatpush1.msra.mxu0 0.0
    %542 = vmatprep.subr.mxu0 0.0
    %543 = vmatpush1.msra.mxu0 0.0
    %544 = vmatprep.subr.mxu0 0.0
    %545 = vmatpush1.msra.mxu0 0.0
    %546 = vmatprep.subr.mxu0 0.0
    %547 = vmatpush1.msra.mxu0 0.0
    %548 = vmatprep.subr.mxu0 0.0
    %549 = vmatpush1.msra.mxu0 0.0
    %550 = vmatprep.subr.mxu0 %v516
    %551 = vmatpush1.msra.mxu0 %v515
    %552 = vmatprep.subr.mxu0 0.0
    %553 = vmatpush2.msra.mxu0 0.0
    %554 = vmatprep.subr.mxu0 0.0
    %555 = vmatpush2.msra.mxu0 0.0
    %556 = vmatprep.subr.mxu0 0.0
    %557 = vmatpush2.msra.mxu0 0.0
    %558 = vmatprep.subr.mxu0 0.0
    %559 = vmatpush2.msra.mxu0 0.0
    %560 = vmatprep.subr.mxu0 0.0
    %561 = vmatpush2.msra.mxu0 0.0
    %562 = vmatprep.subr.mxu0 0.0
    %563 = vmatpush2.msra.mxu0 0.0
    %564 = vmatprep.subr.mxu0 0.0
    %565 = vmatpush2.msra.mxu0 0.0
    %566 = vmatprep.subr.mxu0 0.0
    %567 = vmatpush2.msra.mxu0 0.0
    %568 = vmatprep.subr.mxu0 0.0
    %569 = vmatpush2.msra.mxu0 0.0
    %570 = vmatprep.subr.mxu0 0.0
    %571 = vmatpush2.msra.mxu0 0.0
    %572 = vmatprep.subr.mxu0 0.0
    %573 = vmatpush2.msra.mxu0 0.0
    %574 = vmatprep.subr.mxu0 0.0
    %575 = vmatpush2.msra.mxu0 0.0
    %576 = vmatprep.subr.mxu0 0.0
    %577 = vmatpush2.msra.mxu0 0.0
    %578 = vmatprep.subr.mxu0 0.0
    %579 = vmatpush2.msra.mxu0 0.0
    %580 = vmatprep.subr.mxu0 0.0
    %581 = vmatpush2.msra.mxu0 0.0
    %582 = vmatprep.subr.mxu0 0.0
    %583 = vmatpush2.msra.mxu0 0.0
    %584 = vmatprep.mubr.f32.mxu0 0.0
    %585 = vmatmul.mubr.f32.gmra.mxu0 %v518
    %v586 = vpop.f32.mrf.mxu0
    %v587 = vadd.f32 0.0, %v586
    %v588 = vpop.f32.mrf.mxu0
    %v589 = vadd.f32 0.0, %v588
    %590 = vdwg.mxu0
    %v593 = vrot.slane %v46, 6
    %v594 = vrot.slane %v47, 6
    %597 = vmatprep.subr.mxu0 0.0
    %598 = vmatpush1.xpose.msra.mxu0 0.0
    %599 = vmatprep.subr.mxu0 0.0
    %600 = vmatpush1.xpose.msra.mxu0 0.0
    %601 = vmatprep.subr.mxu0 0.0
    %602 = vmatpush1.xpose.msra.mxu0 0.0
    %603 = vmatprep.subr.mxu0 0.0
    %604 = vmatpush1.xpose.msra.mxu0 0.0
    %605 = vmatprep.subr.mxu0 0.0
    %606 = vmatpush1.xpose.msra.mxu0 0.0
    %607 = vmatprep.subr.mxu0 0.0
    %608 = vmatpush1.xpose.msra.mxu0 0.0
    %609 = vmatprep.subr.mxu0 0.0
    %610 = vmatpush1.xpose.msra.mxu0 0.0
    %611 = vmatprep.subr.mxu0 0.0
    %612 = vmatpush1.xpose.msra.mxu0 0.0
    %613 = vmatprep.subr.mxu0 0.0
    %614 = vmatpush1.xpose.msra.mxu0 0.0
    %615 = vmatprep.subr.mxu0 0.0
    %616 = vmatpush1.xpose.msra.mxu0 0.0
    %617 = vmatprep.subr.mxu0 0.0
    %618 = vmatpush1.xpose.msra.mxu0 0.0
    %619 = vmatprep.subr.mxu0 0.0
    %620 = vmatpush1.xpose.msra.mxu0 0.0
    %621 = vmatprep.subr.mxu0 0.0
    %622 = vmatpush1.xpose.msra.mxu0 0.0
    %623 = vmatprep.subr.mxu0 0.0
    %624 = vmatpush1.xpose.msra.mxu0 0.0
    %625 = vmatprep.subr.mxu0 0.0
    %626 = vmatpush1.xpose.msra.mxu0 0.0
    %627 = vmatprep.subr.mxu0 %v594
    %628 = vmatpush1.xpose.msra.mxu0 %v593
    %629 = vmatprep.subr.mxu0 0.0
    %630 = vmatpush2.xpose.msra.mxu0 0.0
    %631 = vmatprep.subr.mxu0 0.0
    %632 = vmatpush2.xpose.msra.mxu0 0.0
    %633 = vmatprep.subr.mxu0 0.0
    %634 = vmatpush2.xpose.msra.mxu0 0.0
    %635 = vmatprep.subr.mxu0 0.0
    %636 = vmatpush2.xpose.msra.mxu0 0.0
    %637 = vmatprep.subr.mxu0 0.0
    %638 = vmatpush2.xpose.msra.mxu0 0.0
    %639 = vmatprep.subr.mxu0 0.0
    %640 = vmatpush2.xpose.msra.mxu0 0.0
    %641 = vmatprep.subr.mxu0 0.0
    %642 = vmatpush2.xpose.msra.mxu0 0.0
    %643 = vmatprep.subr.mxu0 0.0
    %644 = vmatpush2.xpose.msra.mxu0 0.0
    %645 = vmatprep.subr.mxu0 0.0
    %646 = vmatpush2.xpose.msra.mxu0 0.0
    %647 = vmatprep.subr.mxu0 0.0
    %648 = vmatpush2.xpose.msra.mxu0 0.0
    %649 = vmatprep.subr.mxu0 0.0
    %650 = vmatpush2.xpose.msra.mxu0 0.0
    %651 = vmatprep.subr.mxu0 0.0
    %652 = vmatpush2.xpose.msra.mxu0 0.0
    %653 = vmatprep.subr.mxu0 0.0
    %654 = vmatpush2.xpose.msra.mxu0 0.0
    %655 = vmatprep.subr.mxu0 0.0
    %656 = vmatpush2.xpose.msra.mxu0 0.0
    %657 = vmatprep.subr.mxu0 0.0
    %658 = vmatpush2.xpose.msra.mxu0 0.0
    %659 = vmatprep.subr.mxu0 0.0
    %660 = vmatpush2.xpose.msra.mxu0 0.0
    %661 = vmatprep.mubr.f32.mxu0 %v589
    %662 = vmatmul.mubr.f32.gmra.mxu0 %v587
    %v663 = vpop.f32.mrf.mxu0
    %v664 = vadd.f32 %v43, %v663
    %v665 = vpop.f32.mrf.mxu0
    %666 = vdwg.mxu0
    %v667 = vlaneseq
    %v668 = vand.u32 %v667, 127
    %vm669 = vcmask 8192
    %v670 = vsel %vm669, %v664, -inf
    %671 = vmax.xlane.f32.xlu0 %v670
    %v672 = vpop.xlane.xlu0 %671
    %vm673 = vcmp.eq.f32.partialorder %v664, %v672
    %v674 = vsel %vm673, %v668, 2
    %v675 = vsel %vm669, %v674, 2147483647
    %v676 = vand.u32 %v675, 65535
    %v677 = vshra.s32 %v675, 16
    %v678 = vcvt.s32.f32 %v676
    %v679 = vcvt.s32.f32 %v677
    %680 = vmin.xlane.f32.xlu0 %v679
    %v681 = vpop.xlane.xlu0 %680
    %vm682 = vcmp.eq.f32.partialorder %v679, %v681
    %v683 = vsel %vm682, %v678, inf
    %684 = vmin.xlane.f32.xlu0 %v683
    %v685 = vpop.xlane.xlu0 %684
    %v686 = vcvt.f32.s32 %v685
    %v687 = vcvt.f32.s32 %v681
    %v688 = vshll.u32 %v687, 16
    %v689 = vadd.s32 %v688, %v686
    %v690 = vcvt.s32.f32 %v689
    %vm691 = vcmask 15360
    %v692 = vsel %vm691, %v664, %v690
    %vm693 = vcmask 23552
    %v694 = vsel %vm693, %v692, 0.0
    %vm695 = vcmask 1040384
    %v696 = vsel %vm695, %v694, 0.0
    %698 = vrot.lane.b32.xlu0 %v696, 4
    %v699 = vpop.permute.xlu0 %698
    %v701 = vsel %vm211, %v431, %v699
    %702 = vst [vmem:[%s3] sm:$0xff] %v701
    // Predicated region
    $region18: #{bclassifier_forward.1} parent=1 // pred_check
      _
    $region19: #{bclassifier_forward.1} parent=1 // pred_check_branch
      %704 = sbr.rel (0) target = $region21
    $region20: #{bclassifier_forward.1} parent=1 // pred_region
      _
    $region21: #{bclassifier_forward.1} parent=1 // pred_fallthru
      _
    // Predicated region
    $region22: #{bclassifier_forward.1} parent=1 // pred_check
      _
    $region23: #{bclassifier_forward.1} parent=1 // pred_check_branch
      %706 = sbr.rel (0) target = $region25
    $region24: #{bclassifier_forward.1} parent=1 // pred_region
      _
    $region25: #{bclassifier_forward.1} parent=1 // pred_fallthru
      _
    %707 = vsyncpa [#allocation3], 1

</llo_original>
